<compile_context>
chip_gen: v7x
topology: tpu7x:2x2x1
jax: 0.10.0
libtpu: 0.0.40
codegen_flags: <defaults>
</compile_context>

<pallas_src>
import jax
import jax.numpy as jnp
from jax.experimental import pallas as pl
from jax.experimental.pallas import tpu as pltpu

# small, module-consistent sizes
B, S, H, FF, C, V = 2, 8, 32, 64, 6, 50   # batch, seq, hidden, ffn, classes, vocab
CP = 128                                  # classifier lanes padded to 128 (lane-dense store)

# column offsets inside the packed (H, 352) matrix slab
# layout chosen so the wide loads (w_c, w_qkv, w_ff1) start 128-lane aligned
OFF_WC = 0                 # width CP  = 128
OFF_QKV = CP               # width 3H  = 96
OFF_WO = CP + 3 * H        # width H   = 32
OFF_FF1 = CP + 4 * H       # width FF  = 64
OFF_WP = CP + 4 * H + FF   # width H   = 32
W_SLAB_COLS = CP + 5 * H + FF  # 352


def _layernorm(x, gamma, beta, eps=1e-12):
    mu = jnp.mean(x, axis=-1, keepdims=True)
    var = jnp.mean((x - mu) ** 2, axis=-1, keepdims=True)
    return (x - mu) * jax.lax.rsqrt(var + eps) * gamma + beta


def bert_classifier_kernel(
    vlen_ref,    # (B, 1) int32   valid_length
    x_ref,       # (B, S, H) f32  embedded tokens (whole batch)
    w_ref,       # (H, 352)  f32  packed: [w_c_pad | w_qkv | w_o | w_ff1 | w_p]
    wff2_ref,    # (FF, H)   f32
    vec_ref,     # (10, 128) f32  packed biases / LN params (one row each)
    out_ref,     # (B, CP)   f32  padded logits
):
    x = x_ref[...].reshape(B * S, H)                               # (B*S, H)

    # gen_attention_mask: key position s is valid iff s < valid_length[b]
    # (queries are NOT masked — only the always-valid CLS row reaches the logits)
    vlen = vlen_ref[...].reshape(B, 1, 1)                          # (B,1,1) int32
    pos = jax.lax.broadcasted_iota(jnp.int32, (B, 1, S), 2)
    neg = jnp.where(pos < vlen, 0.0, -1e9).astype(jnp.float32)     # (B,1,S)

    # --- fused QKV projection (one MXU push instead of three) ---
    qkv = jnp.dot(x, w_ref[:, OFF_QKV:OFF_QKV + 3 * H],
                  preferred_element_type=jnp.float32) + vec_ref[0:1, 0:3 * H]
    q = qkv[:, 0:H].reshape(B, S, H)
    k = qkv[:, H:2 * H].reshape(B, S, H)
    v = qkv[:, 2 * H:3 * H].reshape(B, S, H)

    # --- single-head masked self-attention (batched) ---
    scale = 1.0 / jnp.sqrt(jnp.float32(H))
    s = jnp.einsum('bqd,bkd->bqk', q, k,
                   preferred_element_type=jnp.float32) * scale      # (B,S,S)
    s = s + neg
    s = s - jnp.max(s, axis=-1, keepdims=True)
    p = jnp.exp(s)
    p = p * pl.reciprocal(jnp.sum(p, axis=-1, keepdims=True), approx=True)

    ctx = jnp.einsum('bqk,bkd->bqd', p, v,
                     preferred_element_type=jnp.float32).reshape(B * S, H)
    attn = jnp.dot(ctx, w_ref[:, OFF_WO:OFF_WO + H],
                   preferred_element_type=jnp.float32) + vec_ref[1:2, 0:H]
    h1 = _layernorm(x + attn, vec_ref[2:3, 0:H], vec_ref[3:4, 0:H])

    # --- FFN ---
    ff = jnp.dot(h1, w_ref[:, OFF_FF1:OFF_FF1 + FF],
                 preferred_element_type=jnp.float32) + vec_ref[4:5, 0:FF]
    ff = jax.nn.gelu(ff, approximate=True)
    ff = jnp.dot(ff, wff2_ref[...],
                 preferred_element_type=jnp.float32) + vec_ref[5:6, 0:H]
    h2 = _layernorm(h1 + ff, vec_ref[6:7, 0:H], vec_ref[7:8, 0:H])

    # --- BERT pooler: tanh(dense(h[CLS])) ---
    cls = h2.reshape(B, S, H)[:, 0:1, :].reshape(B, H)              # (B, H)
    pooled = jnp.tanh(
        jnp.dot(cls, w_ref[:, OFF_WP:OFF_WP + H],
                preferred_element_type=jnp.float32) + vec_ref[8:9, 0:H])

    # Dropout(dr_rate) is identity in eval mode -> skipped.
    # --- classifier: Linear(hidden_size, num_classes), padded to 128 lanes ---
    out_ref[...] = jnp.dot(pooled, w_ref[:, OFF_WC:OFF_WC + CP],
                           preferred_element_type=jnp.float32) + vec_ref[9:10, 0:CP]


def make_params(key):
    ks = jax.random.split(key, 11)

    def w(k, shape, scale=0.02):
        return (scale * jax.random.normal(k, shape)).astype(jnp.float32)

    z = lambda n: jnp.zeros((n,), jnp.float32)
    o = lambda n: jnp.ones((n,), jnp.float32)

    return dict(
        word_emb=w(ks[0], (V, H)),
        seg_emb=w(ks[1], (2, H)),
        pos_emb=w(ks[2], (S, H)),
        wq=w(ks[3], (H, H)), bq=z(H),
        wk=w(ks[4], (H, H)), bk=z(H),
        wv=w(ks[5], (H, H)), bv=z(H),
        wo=w(ks[6], (H, H)), bo=z(H),
        ln1g=o(H), ln1b=z(H),
        wff1=w(ks[7], (H, FF)), bff1=z(FF),
        wff2=w(ks[8], (FF, H)), bff2=z(H),
        ln2g=o(H), ln2b=z(H),
        wp=w(ks[9], (H, H)), bp=z(H),
        wc=w(ks[10], (H, C)), bc=z(C),   # PyTorch nn.Linear weight transposed
    )


def bert_classifier_forward(token_ids, valid_length, segment_ids, params):
    p = params

    # Embedding gathers (glue, plain JAX) -> (B, S, H) float32
    x = (p["word_emb"][token_ids]
         + p["seg_emb"][segment_ids]
         + p["pos_emb"][None, :, :]).astype(jnp.float32)

    # --- pack weights into slabs (few big DMAs instead of 20 tiny ones) ---
    wc_pad = jnp.pad(p["wc"], ((0, 0), (0, CP - C)))                 # (H, 128)
    bc_pad = jnp.pad(p["bc"], (0, CP - C))                           # (128,)

    w_slab = jnp.concatenate(
        [wc_pad,                                       # [0, 128)
         p["wq"], p["wk"], p["wv"],                    # [128, 224)  fused QKV
         p["wo"],                                      # [224, 256)
         p["wff1"],                                    # [256, 320)
         p["wp"]],                                     # [320, 352)
        axis=1).astype(jnp.float32)                    # (H, 352)

    def row(v):
        v = v.reshape(-1)
        return jnp.pad(v, (0, CP - v.shape[0]))[None, :]

    vec_slab = jnp.concatenate([
        row(jnp.concatenate([p["bq"], p["bk"], p["bv"]])),   # 0: fused QKV bias
        row(p["bo"]),                                        # 1
        row(p["ln1g"]), row(p["ln1b"]),                      # 2, 3
        row(p["bff1"]), row(p["bff2"]),                      # 4, 5
        row(p["ln2g"]), row(p["ln2b"]),                      # 6, 7
        row(p["bp"]),                                        # 8
        bc_pad[None, :],                                     # 9
    ], axis=0).astype(jnp.float32)                           # (10, 128)

    vlen = valid_length.astype(jnp.int32).reshape(B, 1)

    # single invocation, no grid: whole batch in one tile, one output store
    logits_pad = pl.pallas_call(
        bert_classifier_kernel,
        out_shape=jax.ShapeDtypeStruct((B, CP), jnp.float32),
        in_specs=[pl.BlockSpec(memory_space=pltpu.MemorySpace.VMEM)] * 5,
        out_specs=pl.BlockSpec(memory_space=pltpu.MemorySpace.VMEM),
    )(vlen, x, w_slab, p["wff2"], vec_slab)

    return logits_pad[:, :C]


if __name__ == "__main__":
    key = jax.random.PRNGKey(0)
    pkey, tkey, skey = jax.random.split(key, 3)

    params = make_params(pkey)
    token_ids = jax.random.randint(tkey, (B, S), 0, V, dtype=jnp.int32)
    segment_ids = jax.random.randint(skey, (B, S), 0, 2, dtype=jnp.int32)
    valid_length = jnp.array([5, 8], dtype=jnp.int32)   # like KoBERT valid_length

    logits = bert_classifier_forward(token_ids, valid_length, segment_ids, params)
    jax.block_until_ready(logits)
    assert logits.shape == (B, C) and logits.dtype == jnp.float32
    assert bool(jnp.all(jnp.isfinite(logits)))

    print("KERNEL_OK")
</pallas_src>

<mosaic_0001>
module attributes {stable_mosaic.version = 11 : i64} {
  func.func @bert_classifier_kernel(%arg0: memref<2x1xi32, #tpu.memory_space<vmem>>, %arg1: memref<2x8x32xf32, #tpu.memory_space<vmem>>, %arg2: memref<32x352xf32, #tpu.memory_space<vmem>>, %arg3: memref<64x32xf32, #tpu.memory_space<vmem>>, %arg4: memref<10x128xf32, #tpu.memory_space<vmem>>, %arg5: memref<2x128xf32, #tpu.memory_space<vmem>>) attributes {dimension_semantics = [], scalar_prefetch = 0 : i64, scratch_operands = 0 : i64, tpu.core_type = #tpu.core_type<tc>} {
    %c0 = arith.constant 0 : index
    %c0_0 = arith.constant 0 : index
    %c0_1 = arith.constant 0 : index
    %0 = vector.load %arg1[%c0, %c0_0, %c0_1] : memref<2x8x32xf32, #tpu.memory_space<vmem>>, vector<2x8x32xf32>
    %1 = vector.shape_cast %0 : vector<2x8x32xf32> to vector<16x32xf32>
    %c0_2 = arith.constant 0 : index
    %c0_3 = arith.constant 0 : index
    %2 = vector.load %arg0[%c0_2, %c0_3] : memref<2x1xi32, #tpu.memory_space<vmem>>, vector<2x1xi32>
    %3 = vector.shape_cast %2 : vector<2x1xi32> to vector<2x1x1xi32>
    %4 = tpu.iota {dimensions = array<i32: 2>} : vector<2x1x8xi32>
    %5 = vector.broadcast %3 : vector<2x1x1xi32> to vector<2x1x8xi32>
    %6 = arith.cmpi slt, %4, %5 : vector<2x1x8xi32>
    %cst = arith.constant 0.000000e+00 : f32
    %cst_4 = arith.constant -1.000000e+09 : f32
    %7 = vector.broadcast %cst : f32 to vector<2x1x8xf32>
    %8 = vector.broadcast %cst_4 : f32 to vector<2x1x8xf32>
    %9 = arith.select %6, %7, %8 : vector<2x1x8xi1>, vector<2x1x8xf32>
    %c0_5 = arith.constant 0 : index
    %c128 = arith.constant 128 : index
    %10 = vector.load %arg2[%c0_5, %c128] : memref<32x352xf32, #tpu.memory_space<vmem>>, vector<32x96xf32>
    %cst_6 = arith.constant dense<0.000000e+00> : vector<16x96xf32>
    %11 = tpu.matmul %1, %10, %cst_6 {dimension_numbers = #tpu.dot_dimension_numbers<[1], [0], [0], [1], [0, 0, 1, 1], [], []>} : vector<16x32xf32>, vector<32x96xf32>, vector<16x96xf32> -> vector<16x96xf32>
    %c0_7 = arith.constant 0 : index
    %c0_8 = arith.constant 0 : index
    %12 = vector.load %arg4[%c0_7, %c0_8] : memref<10x128xf32, #tpu.memory_space<vmem>>, vector<1x96xf32>
    %13 = vector.broadcast %12 : vector<1x96xf32> to vector<16x96xf32>
    %14 = arith.addf %11, %13 : vector<16x96xf32>
    %15 = vector.extract_strided_slice %14 {offsets = [0, 0], sizes = [16, 32], strides = [1, 1]} : vector<16x96xf32> to vector<16x32xf32>
    %16 = vector.shape_cast %15 : vector<16x32xf32> to vector<2x8x32xf32>
    %17 = vector.extract_strided_slice %14 {offsets = [0, 32], sizes = [16, 32], strides = [1, 1]} : vector<16x96xf32> to vector<16x32xf32>
    %18 = vector.shape_cast %17 : vector<16x32xf32> to vector<2x8x32xf32>
    %19 = vector.extract_strided_slice %14 {offsets = [0, 64], sizes = [16, 32], strides = [1, 1]} : vector<16x96xf32> to vector<16x32xf32>
    %20 = vector.shape_cast %19 : vector<16x32xf32> to vector<2x8x32xf32>
    %cst_9 = arith.constant 3.200000e+01 : f32
    %21 = math.sqrt %cst_9 : f32
    %cst_10 = arith.constant 1.000000e+00 : f32
    %22 = arith.divf %cst_10, %21 : f32
    "tpu.trace_start"() <{level = 10 : i32, message = "bqd,bkd->bqk"}> : () -> ()
    %cst_11 = arith.constant dense<0.000000e+00> : vector<2x8x8xf32>
    %23 = tpu.matmul %16, %18, %cst_11 {dimension_numbers = #tpu.dot_dimension_numbers<[2], [2], [1], [1], [0, 0, 0, 1, 1, 1], [0], [0]>} : vector<2x8x32xf32>, vector<2x8x32xf32>, vector<2x8x8xf32> -> vector<2x8x8xf32>
    "tpu.trace_stop"() : () -> ()
    %24 = vector.broadcast %22 : f32 to vector<2x8x8xf32>
    %25 = arith.mulf %23, %24 : vector<2x8x8xf32>
    %26 = vector.broadcast %9 : vector<2x1x8xf32> to vector<2x8x8xf32>
    %27 = arith.addf %25, %26 : vector<2x8x8xf32>
    %cst_12 = arith.constant dense<0xFF800000> : vector<2x8xf32>
    %28 = vector.multi_reduction <maximumf>, %27, %cst_12 [2] : vector<2x8x8xf32> to vector<2x8xf32>
    %29 = vector.shape_cast %28 : vector<2x8xf32> to vector<2x8x1xf32>
    %30 = vector.broadcast %29 : vector<2x8x1xf32> to vector<2x8x8xf32>
    %31 = arith.subf %27, %30 : vector<2x8x8xf32>
    %32 = math.exp %31 : vector<2x8x8xf32>
    %cst_13 = arith.constant dense<0.000000e+00> : vector<2x8xf32>
    %33 = vector.multi_reduction <add>, %32, %cst_13 [2] : vector<2x8x8xf32> to vector<2x8xf32>
    %34 = vector.shape_cast %33 : vector<2x8xf32> to vector<2x8x1xf32>
    %35 = tpu.reciprocal %34 {approx = true} : vector<2x8x1xf32> -> vector<2x8x1xf32>
    %36 = vector.broadcast %35 : vector<2x8x1xf32> to vector<2x8x8xf32>
    %37 = arith.mulf %32, %36 : vector<2x8x8xf32>
    "tpu.trace_start"() <{level = 10 : i32, message = "bqk,bkd->bqd"}> : () -> ()
    %cst_14 = arith.constant dense<0.000000e+00> : vector<2x8x32xf32>
    %38 = tpu.matmul %37, %20, %cst_14 {dimension_numbers = #tpu.dot_dimension_numbers<[2], [1], [1], [2], [0, 0, 0, 1, 1, 2], [0], [0]>} : vector<2x8x8xf32>, vector<2x8x32xf32>, vector<2x8x32xf32> -> vector<2x8x32xf32>
    "tpu.trace_stop"() : () -> ()
    %39 = vector.shape_cast %38 : vector<2x8x32xf32> to vector<16x32xf32>
    %c0_15 = arith.constant 0 : index
    %c224 = arith.constant 224 : index
    %40 = vector.load %arg2[%c0_15, %c224] : memref<32x352xf32, #tpu.memory_space<vmem>>, vector<32x32xf32>
    %cst_16 = arith.constant dense<0.000000e+00> : vector<16x32xf32>
    %41 = tpu.matmul %39, %40, %cst_16 {dimension_numbers = #tpu.dot_dimension_numbers<[1], [0], [0], [1], [0, 0, 1, 1], [], []>} : vector<16x32xf32>, vector<32x32xf32>, vector<16x32xf32> -> vector<16x32xf32>
    %c1 = arith.constant 1 : index
    %c0_17 = arith.constant 0 : index
    %42 = vector.load %arg4[%c1, %c0_17] : memref<10x128xf32, #tpu.memory_space<vmem>>, vector<1x32xf32>
    %43 = vector.broadcast %42 : vector<1x32xf32> to vector<16x32xf32>
    %44 = arith.addf %41, %43 : vector<16x32xf32>
    %45 = arith.addf %1, %44 : vector<16x32xf32>
    %c2 = arith.constant 2 : index
    %c0_18 = arith.constant 0 : index
    %46 = vector.load %arg4[%c2, %c0_18] : memref<10x128xf32, #tpu.memory_space<vmem>>, vector<1x32xf32>
    %c3 = arith.constant 3 : index
    %c0_19 = arith.constant 0 : index
    %47 = vector.load %arg4[%c3, %c0_19] : memref<10x128xf32, #tpu.memory_space<vmem>>, vector<1x32xf32>
    %cst_20 = arith.constant dense<0.000000e+00> : vector<16xf32>
    %48 = vector.multi_reduction <add>, %45, %cst_20 [1] : vector<16x32xf32> to vector<16xf32>
    %49 = vector.shape_cast %48 : vector<16xf32> to vector<16x1xf32>
    %cst_21 = arith.constant 3.200000e+01 : f32
    %50 = vector.broadcast %cst_21 : f32 to vector<16x1xf32>
    %51 = arith.divf %49, %50 : vector<16x1xf32>
    %52 = vector.broadcast %51 : vector<16x1xf32> to vector<16x32xf32>
    %53 = arith.subf %45, %52 : vector<16x32xf32>
    %54 = arith.mulf %53, %53 : vector<16x32xf32>
    %cst_22 = arith.constant dense<0.000000e+00> : vector<16xf32>
    %55 = vector.multi_reduction <add>, %54, %cst_22 [1] : vector<16x32xf32> to vector<16xf32>
    %56 = vector.shape_cast %55 : vector<16xf32> to vector<16x1xf32>
    %cst_23 = arith.constant 3.200000e+01 : f32
    %57 = vector.broadcast %cst_23 : f32 to vector<16x1xf32>
    %58 = arith.divf %56, %57 : vector<16x1xf32>
    %59 = vector.broadcast %51 : vector<16x1xf32> to vector<16x32xf32>
    %60 = arith.subf %45, %59 : vector<16x32xf32>
    %cst_24 = arith.constant 9.99999996E-13 : f32
    %61 = vector.broadcast %cst_24 : f32 to vector<16x1xf32>
    %62 = arith.addf %58, %61 : vector<16x1xf32>
    %63 = math.rsqrt %62 : vector<16x1xf32>
    %64 = vector.broadcast %63 : vector<16x1xf32> to vector<16x32xf32>
    %65 = arith.mulf %60, %64 : vector<16x32xf32>
    %66 = vector.broadcast %46 : vector<1x32xf32> to vector<16x32xf32>
    %67 = arith.mulf %65, %66 : vector<16x32xf32>
    %68 = vector.broadcast %47 : vector<1x32xf32> to vector<16x32xf32>
    %69 = arith.addf %67, %68 : vector<16x32xf32>
    %c0_25 = arith.constant 0 : index
    %c256 = arith.constant 256 : index
    %70 = vector.load %arg2[%c0_25, %c256] : memref<32x352xf32, #tpu.memory_space<vmem>>, vector<32x64xf32>
    %cst_26 = arith.constant dense<0.000000e+00> : vector<16x64xf32>
    %71 = tpu.matmul %69, %70, %cst_26 {dimension_numbers = #tpu.dot_dimension_numbers<[1], [0], [0], [1], [0, 0, 1, 1], [], []>} : vector<16x32xf32>, vector<32x64xf32>, vector<16x64xf32> -> vector<16x64xf32>
    %c4 = arith.constant 4 : index
    %c0_27 = arith.constant 0 : index
    %72 = vector.load %arg4[%c4, %c0_27] : memref<10x128xf32, #tpu.memory_space<vmem>>, vector<1x64xf32>
    %73 = vector.broadcast %72 : vector<1x64xf32> to vector<16x64xf32>
    %74 = arith.addf %71, %73 : vector<16x64xf32>
    %75 = arith.mulf %74, %74 : vector<16x64xf32>
    %76 = arith.mulf %74, %75 : vector<16x64xf32>
    %cst_28 = arith.constant 4.471500e-02 : f32
    %77 = vector.broadcast %cst_28 : f32 to vector<16x64xf32>
    %78 = arith.mulf %77, %76 : vector<16x64xf32>
    %79 = arith.addf %74, %78 : vector<16x64xf32>
    %cst_29 = arith.constant 0.797884583 : f32
    %80 = vector.broadcast %cst_29 : f32 to vector<16x64xf32>
    %81 = arith.mulf %80, %79 : vector<16x64xf32>
    %82 = math.tanh %81 : vector<16x64xf32>
    %cst_30 = arith.constant 1.000000e+00 : f32
    %83 = vector.broadcast %cst_30 : f32 to vector<16x64xf32>
    %84 = arith.addf %83, %82 : vector<16x64xf32>
    %cst_31 = arith.constant 5.000000e-01 : f32
    %85 = vector.broadcast %cst_31 : f32 to vector<16x64xf32>
    %86 = arith.mulf %85, %84 : vector<16x64xf32>
    %87 = arith.mulf %74, %86 : vector<16x64xf32>
    %c0_32 = arith.constant 0 : index
    %c0_33 = arith.constant 0 : index
    %88 = vector.load %arg3[%c0_32, %c0_33] : memref<64x32xf32, #tpu.memory_space<vmem>>, vector<64x32xf32>
    %cst_34 = arith.constant dense<0.000000e+00> : vector<16x32xf32>
    %89 = tpu.matmul %87, %88, %cst_34 {dimension_numbers = #tpu.dot_dimension_numbers<[1], [0], [0], [1], [0, 0, 1, 1], [], []>} : vector<16x64xf32>, vector<64x32xf32>, vector<16x32xf32> -> vector<16x32xf32>
    %c5 = arith.constant 5 : index
    %c0_35 = arith.constant 0 : index
    %90 = vector.load %arg4[%c5, %c0_35] : memref<10x128xf32, #tpu.memory_space<vmem>>, vector<1x32xf32>
    %91 = vector.broadcast %90 : vector<1x32xf32> to vector<16x32xf32>
    %92 = arith.addf %89, %91 : vector<16x32xf32>
    %93 = arith.addf %69, %92 : vector<16x32xf32>
    %c6 = arith.constant 6 : index
    %c0_36 = arith.constant 0 : index
    %94 = vector.load %arg4[%c6, %c0_36] : memref<10x128xf32, #tpu.memory_space<vmem>>, vector<1x32xf32>
    %c7 = arith.constant 7 : index
    %c0_37 = arith.constant 0 : index
    %95 = vector.load %arg4[%c7, %c0_37] : memref<10x128xf32, #tpu.memory_space<vmem>>, vector<1x32xf32>
    %cst_38 = arith.constant dense<0.000000e+00> : vector<16xf32>
    %96 = vector.multi_reduction <add>, %93, %cst_38 [1] : vector<16x32xf32> to vector<16xf32>
    %97 = vector.shape_cast %96 : vector<16xf32> to vector<16x1xf32>
    %cst_39 = arith.constant 3.200000e+01 : f32
    %98 = vector.broadcast %cst_39 : f32 to vector<16x1xf32>
    %99 = arith.divf %97, %98 : vector<16x1xf32>
    %100 = vector.broadcast %99 : vector<16x1xf32> to vector<16x32xf32>
    %101 = arith.subf %93, %100 : vector<16x32xf32>
    %102 = arith.mulf %101, %101 : vector<16x32xf32>
    %cst_40 = arith.constant dense<0.000000e+00> : vector<16xf32>
    %103 = vector.multi_reduction <add>, %102, %cst_40 [1] : vector<16x32xf32> to vector<16xf32>
    %104 = vector.shape_cast %103 : vector<16xf32> to vector<16x1xf32>
    %cst_41 = arith.constant 3.200000e+01 : f32
    %105 = vector.broadcast %cst_41 : f32 to vector<16x1xf32>
    %106 = arith.divf %104, %105 : vector<16x1xf32>
    %107 = vector.broadcast %99 : vector<16x1xf32> to vector<16x32xf32>
    %108 = arith.subf %93, %107 : vector<16x32xf32>
    %cst_42 = arith.constant 9.99999996E-13 : f32
    %109 = vector.broadcast %cst_42 : f32 to vector<16x1xf32>
    %110 = arith.addf %106, %109 : vector<16x1xf32>
    %111 = math.rsqrt %110 : vector<16x1xf32>
    %112 = vector.broadcast %111 : vector<16x1xf32> to vector<16x32xf32>
    %113 = arith.mulf %108, %112 : vector<16x32xf32>
    %114 = vector.broadcast %94 : vector<1x32xf32> to vector<16x32xf32>
    %115 = arith.mulf %113, %114 : vector<16x32xf32>
    %116 = vector.broadcast %95 : vector<1x32xf32> to vector<16x32xf32>
    %117 = arith.addf %115, %116 : vector<16x32xf32>
    %118 = vector.shape_cast %117 : vector<16x32xf32> to vector<2x8x32xf32>
    %119 = vector.extract_strided_slice %118 {offsets = [0, 0, 0], sizes = [2, 1, 32], strides = [1, 1, 1]} : vector<2x8x32xf32> to vector<2x1x32xf32>
    %120 = vector.shape_cast %119 : vector<2x1x32xf32> to vector<2x32xf32>
    %c0_43 = arith.constant 0 : index
    %c320 = arith.constant 320 : index
    %121 = vector.load %arg2[%c0_43, %c320] : memref<32x352xf32, #tpu.memory_space<vmem>>, vector<32x32xf32>
    %cst_44 = arith.constant dense<0.000000e+00> : vector<2x32xf32>
    %122 = tpu.matmul %120, %121, %cst_44 {dimension_numbers = #tpu.dot_dimension_numbers<[1], [0], [0], [1], [0, 0, 1, 1], [], []>} : vector<2x32xf32>, vector<32x32xf32>, vector<2x32xf32> -> vector<2x32xf32>
    %c8 = arith.constant 8 : index
    %c0_45 = arith.constant 0 : index
    %123 = vector.load %arg4[%c8, %c0_45] : memref<10x128xf32, #tpu.memory_space<vmem>>, vector<1x32xf32>
    %124 = vector.broadcast %123 : vector<1x32xf32> to vector<2x32xf32>
    %125 = arith.addf %122, %124 : vector<2x32xf32>
    %126 = math.tanh %125 : vector<2x32xf32>
    %c0_46 = arith.constant 0 : index
    %c0_47 = arith.constant 0 : index
    %127 = vector.load %arg2[%c0_46, %c0_47] : memref<32x352xf32, #tpu.memory_space<vmem>>, vector<32x128xf32>
    %cst_48 = arith.constant dense<0.000000e+00> : vector<2x128xf32>
    %128 = tpu.matmul %126, %127, %cst_48 {dimension_numbers = #tpu.dot_dimension_numbers<[1], [0], [0], [1], [0, 0, 1, 1], [], []>} : vector<2x32xf32>, vector<32x128xf32>, vector<2x128xf32> -> vector<2x128xf32>
    %c9 = arith.constant 9 : index
    %c0_49 = arith.constant 0 : index
    %129 = vector.load %arg4[%c9, %c0_49] : memref<10x128xf32, #tpu.memory_space<vmem>>, vector<1x128xf32>
    %130 = vector.broadcast %129 : vector<1x128xf32> to vector<2x128xf32>
    %131 = arith.addf %128, %130 : vector<2x128xf32>
    %c0_50 = arith.constant 0 : index
    %c0_51 = arith.constant 0 : index
    %132 = vector.load %arg5[%c0_50, %c0_51] : memref<2x128xf32, #tpu.memory_space<vmem>>, vector<2x128xf32>
    tpu.vector_store %arg5[%c0_50, %c0_51], %131 {strides = array<i32>} : memref<2x128xf32, #tpu.memory_space<vmem>>, vector<2x128xf32>,
    return
  }
}

</mosaic_0001>

<llo_original>
// kernel: tpu_custom_call.1
$region0: #{tpu_custom_call.1}
  #allocation0 [shape = 'u32[]', space=smem, size = 0x4, offset = 0x4, fixed_abs, tag = 'smem constant byte address 0x4 - core index']
  #allocation1 [shape = 'u32[144,128]{1,0:T(1,128)}', space=vmem, size = 0x12000, scoped, tag = 'internal scratch']
  %s0 = inlined_call_operand.vmem [shape: s32[2,1], index: 0, kind: input, shape index: {}]
  %s1 = inlined_call_operand.hbm [shape: f32[2,8,32], index: 1, kind: input, shape index: {}]
  %s2 = inlined_call_operand.vmem [shape: f32[32,352], index: 2, kind: input, shape index: {}]
  %s3 = inlined_call_operand.vmem [shape: f32[64,32], index: 3, kind: input, shape index: {}]
  %s4 = inlined_call_operand.vmem [shape: f32[10,128], index: 4, kind: input, shape index: {}]
  %s5 = inlined_call_operand.hbm [shape: f32[2,128], index: 5, kind: output, shape index: {}]
  %s6 = sld [smem:[#allocation0]]
  $region34: #{tpu_custom_call.1} parent=0
    _
  %s8 = ssub.s32 1, %s6
  %s9 = scalar_select 0, %s8, %s6
  $region1: #{tpu_custom_call.1} parent=0
    #allocation2 [shape = 'u8[8192]{0}', space=vmem, size = 0x2000, scoped, tag = 'input window, operand 1, single buffered']
    #allocation3 [shape = 's32[1]{0}', space=sflag, size = 0x4, scoped, tag = 'scoped memory for tpu_custom_call.1']
    #allocation4 [shape = 's32[1]{0}', space=sflag, size = 0x4, scoped, tag = 'scoped memory for tpu_custom_call.1']
    #allocation5 [shape = 'u8[1024]{0}', space=vmem, size = 0x400, scoped, tag = 'output window, operand 0, single buffered']
    %10 = vsyncpa [#allocation3], 0
    %11 = vsyncpa [#allocation4], 0
    // Predicated region
    $region2: #{tpu_custom_call.1} parent=1 // pred_check
      _
    $region3: #{tpu_custom_call.1} parent=1 // pred_check_branch
      %13 = sbr.rel (0) target = $region5
    $region4: #{tpu_custom_call.1} parent=1 // pred_region
      _
    $region5: #{tpu_custom_call.1} parent=1 // pred_fallthru
      _
    // Predicated region
    $region6: #{tpu_custom_call.1} parent=1 // pred_check
      _
    $region7: #{tpu_custom_call.1} parent=1 // pred_check_branch
      %15 = sbr.rel (0) target = $region9
    $region8: #{tpu_custom_call.1} parent=1 // pred_region
      %s17 = ssub.s32 256, 256
      %18 = vsyncadd [#allocation3], %s17
      %s19 = sshll.u32 [#allocation2], 4
      %s20 = int_to_ptr.vmem [resolvable:$true] %s19
      %25 = dma.hbm_to_vmem [thread:$0]  %s1, 256, %s20, [#allocation3], 128, 128, 8
    $region9: #{tpu_custom_call.1} parent=1 // pred_fallthru
      _
    // Predicated region
    $region10: #{tpu_custom_call.1} parent=1 // pred_check
      _
    $region11: #{tpu_custom_call.1} parent=1 // pred_check_branch
      %27 = sbr.rel (0) target = $region13
    $region12: #{tpu_custom_call.1} parent=1 // pred_region
      _
    $region13: #{tpu_custom_call.1} parent=1 // pred_fallthru
      _
    // Predicated region
    $region14: #{tpu_custom_call.1} parent=1 // pred_check
      _
    $region15: #{tpu_custom_call.1} parent=1 // pred_check_branch
      %29 = sbr.rel (0) target = $region17
    $region16: #{tpu_custom_call.1} parent=1 // pred_region
      _
    $region17: #{tpu_custom_call.1} parent=1 // pred_fallthru
      _
    // Predicated region
    $region18: #{tpu_custom_call.1} parent=1 // pred_check
      _
    $region19: #{tpu_custom_call.1} parent=1 // pred_check_branch
      %31 = sbr.rel (0) target = $region21
    $region20: #{tpu_custom_call.1} parent=1 // pred_region
      _
    $region21: #{tpu_custom_call.1} parent=1 // pred_fallthru
      _
    // Predicated region
    $region22: #{tpu_custom_call.1} parent=1 // pred_check
      _
    $region23: #{tpu_custom_call.1} parent=1 // pred_check_branch
      %33 = sbr.rel (0) target = $region25
    $region24: #{tpu_custom_call.1} parent=1 // pred_region
      %34 = dma.done [#allocation3], 256
    $region25: #{tpu_custom_call.1} parent=1 // pred_fallthru
      _
    %v35 = vld [vmem:[#allocation2] sm:$0xff]
    %v36 = vld [vmem:[#allocation2 + $0x8] sm:$0xff]
    %v37 = vld [vmem:[%s0] sm:$0x3]
    %v39 = vunpack.c.l.s4 1966171168
    %v40 = vunpack.c.0.s8 %v39
    %v41 = vlaneseq
    %v42 = vshrl.u32 %v41, 7
    %v43 = vsub.s32 %v40, %v42
    %v44 = vrot.slane %v37, %v43
    %v45 = vcombine.high %v44, %v44
    %v47 = vunpack.c.l.s4 1966171168
    %v48 = vunpack.c.0.s8 %v47
    %v49 = vlaneseq
    %v50 = vshrl.u32 %v49, 7
    %v51 = vsub.s32 %v48, %v50
    %v52 = vrot.slane %v44, %v51
    %v54 = vunpack.c.l.s4 1966171168
    %v55 = vunpack.c.0.s8 %v54
    %v56 = vlaneseq
    %v57 = vshrl.u32 %v56, 7
    %v58 = vsub.s32 %v55, %v57
    %v59 = vrot.slane %v45, %v58
    %v60 = vlaneseq
    %v61 = vand.u32 %v60, 127
    %62 = vset.pattern.permute.xlu0 0
    %63 = vperm.xlu0 %62, %v52
    %v64 = vpop.permute.xlu0 %63
    %v65 = vlaneseq
    %v66 = vshrl.u32 %v65, 7
    %v67 = vsub.s32 0, %v66
    %v68 = vrot.slane %v64, %v67
    %69 = vset.pattern.permute.xlu0 0
    %70 = vperm.xlu0 %69, %v59
    %v71 = vpop.permute.xlu0 %70
    %v72 = vlaneseq
    %v73 = vshrl.u32 %v72, 7
    %v74 = vsub.s32 0, %v73
    %v75 = vrot.slane %v71, %v74
    %vm76 = vcmp.lt.s32.totalorder %v61, %v68
    %vm77 = vcmp.lt.s32.totalorder %v61, %v75
    %v78 = vsel %vm76, 0.0, -1e+09
    %v79 = vsel %vm77, 0.0, -1e+09
    %v80 = vld [vmem:[%s2 + $0x8] sm:$0xff]
    %v81 = vld [vmem:[%s2 + $0x20] sm:$0xff]
    %v82 = vld [vmem:[%s2 + $0x38] sm:$0xff]
    %v83 = vld [vmem:[%s2 + $0x50] sm:$0xff]
    %v84 = vld [vmem:[%s4] sm:$0x1]
    %v85 = vlaneseq
    %v86 = vshrl.u32 %v85, 7
    %v87 = vsub.s32 0, %v86
    %v88 = vrot.slane %v84, %v87
    %vm89 = vcmask 261120
    %v91 = vsel %vm89, %v35, 0
    %v94 = vsel %vm89, %v36, 0
    %96 = vmatprep.subr.mxu0 0.0
    %97 = vmatpush1.msra.mxu0 %v80
    %98 = vmatprep.subr.mxu0 0.0
    %99 = vmatpush1.msra.mxu0 %v81
    %100 = vmatprep.subr.mxu0 0.0
    %101 = vmatpush1.msra.mxu0 %v82
    %102 = vmatprep.subr.mxu0 0.0
    %103 = vmatpush1.msra.mxu0 %v83
    %104 = vmatprep.subr.mxu0 0.0
    %105 = vmatpush1.msra.mxu0 0.0
    %106 = vmatprep.subr.mxu0 0.0
    %107 = vmatpush1.msra.mxu0 0.0
    %108 = vmatprep.subr.mxu0 0.0
    %109 = vmatpush1.msra.mxu0 0.0
    %110 = vmatprep.subr.mxu0 0.0
    %111 = vmatpush1.msra.mxu0 0.0
    %112 = vmatprep.subr.mxu0 0.0
    %113 = vmatpush1.msra.mxu0 0.0
    %114 = vmatprep.subr.mxu0 0.0
    %115 = vmatpush1.msra.mxu0 0.0
    %116 = vmatprep.subr.mxu0 0.0
    %117 = vmatpush1.msra.mxu0 0.0
    %118 = vmatprep.subr.mxu0 0.0
    %119 = vmatpush1.msra.mxu0 0.0
    %120 = vmatprep.subr.mxu0 0.0
    %121 = vmatpush1.msra.mxu0 0.0
    %122 = vmatprep.subr.mxu0 0.0
    %123 = vmatpush1.msra.mxu0 0.0
    %124 = vmatprep.subr.mxu0 0.0
    %125 = vmatpush1.msra.mxu0 0.0
    %126 = vmatprep.subr.mxu0 0.0
    %127 = vmatpush1.msra.mxu0 0.0
    %128 = vmatprep.subr.mxu0 0.0
    %129 = vmatpush1.msra.mxu0 0.0
    %130 = vmatprep.subr.mxu0 0.0
    %131 = vmatpush1.msra.mxu0 0.0
    %132 = vmatprep.subr.mxu0 0.0
    %133 = vmatpush1.msra.mxu0 0.0
    %134 = vmatprep.subr.mxu0 0.0
    %135 = vmatpush1.msra.mxu0 0.0
    %136 = vmatprep.subr.mxu0 0.0
    %137 = vmatpush1.msra.mxu0 0.0
    %138 = vmatprep.subr.mxu0 0.0
    %139 = vmatpush1.msra.mxu0 0.0
    %140 = vmatprep.subr.mxu0 0.0
    %141 = vmatpush1.msra.mxu0 0.0
    %142 = vmatprep.subr.mxu0 0.0
    %143 = vmatpush1.msra.mxu0 0.0
    %144 = vmatprep.subr.mxu0 0.0
    %145 = vmatpush1.msra.mxu0 0.0
    %146 = vmatprep.subr.mxu0 0.0
    %147 = vmatpush1.msra.mxu0 0.0
    %148 = vmatprep.subr.mxu0 0.0
    %149 = vmatpush1.msra.mxu0 0.0
    %150 = vmatprep.subr.mxu0 0.0
    %151 = vmatpush1.msra.mxu0 0.0
    %152 = vmatprep.subr.mxu0 0.0
    %153 = vmatpush1.msra.mxu0 0.0
    %154 = vmatprep.subr.mxu0 0.0
    %155 = vmatpush1.msra.mxu0 0.0
    %156 = vmatprep.subr.mxu0 0.0
    %157 = vmatpush1.msra.mxu0 0.0
    %158 = vmatprep.subr.mxu0 0.0
    %159 = vmatpush1.msra.mxu0 0.0
    %160 = vmatprep.mubr.f32.mxu0 0.0
    %161 = vmatmul.mubr.f32.gmra.mrb[0].mxu0 %v91
    %v162 = vpop.f32.mrb[0].mxu0
    %v163 = vadd.f32 %v88, %v162
    %v164 = vpop.f32.mrb[0].mxu0
    %165 = vmatprep.mubr.f32.mxu0 0.0
    %166 = vmatmul.mubr.f32.gmra.mrb[0].mxu0 %v94
    %v167 = vpop.f32.mrb[0].mxu0
    %v168 = vadd.f32 %v88, %v167
    %v169 = vpop.f32.mrb[0].mxu0
    %170 = vdwg.mxu0
    %172 = vrot.lane.b32.xlu0 %v163, 96
    %v173 = vpop.permute.xlu0 %172
    %v174 = vsel %vm89, %v163, 0
    %v176 = vsel %vm89, %v173, 0
    %178 = vmatprep.subr.mxu0 0.0
    %179 = vmatpush1.xpose.msra.mxu0 %v176
    %180 = vmatprep.subr.mxu0 0.0
    %181 = vmatpush1.xpose.msra.mxu0 0.0
    %182 = vmatprep.subr.mxu0 0.0
    %183 = vmatpush1.xpose.msra.mxu0 0.0
    %184 = vmatprep.subr.mxu0 0.0
    %185 = vmatpush1.xpose.msra.mxu0 0.0
    %186 = vmatprep.subr.mxu0 0.0
    %187 = vmatpush1.xpose.msra.mxu0 0.0
    %188 = vmatprep.subr.mxu0 0.0
    %189 = vmatpush1.xpose.msra.mxu0 0.0
    %190 = vmatprep.subr.mxu0 0.0
    %191 = vmatpush1.xpose.msra.mxu0 0.0
    %192 = vmatprep.subr.mxu0 0.0
    %193 = vmatpush1.xpose.msra.mxu0 0.0
    %194 = vmatprep.subr.mxu0 0.0
    %195 = vmatpush1.xpose.msra.mxu0 0.0
    %196 = vmatprep.subr.mxu0 0.0
    %197 = vmatpush1.xpose.msra.mxu0 0.0
    %198 = vmatprep.subr.mxu0 0.0
    %199 = vmatpush1.xpose.msra.mxu0 0.0
    %200 = vmatprep.subr.mxu0 0.0
    %201 = vmatpush1.xpose.msra.mxu0 0.0
    %202 = vmatprep.subr.mxu0 0.0
    %203 = vmatpush1.xpose.msra.mxu0 0.0
    %204 = vmatprep.subr.mxu0 0.0
    %205 = vmatpush1.xpose.msra.mxu0 0.0
    %206 = vmatprep.subr.mxu0 0.0
    %207 = vmatpush1.xpose.msra.mxu0 0.0
    %208 = vmatprep.subr.mxu0 0.0
    %209 = vmatpush1.xpose.msra.mxu0 0.0
    %210 = vmatprep.subr.mxu0 0.0
    %211 = vmatpush1.xpose.msra.mxu0 0.0
    %212 = vmatprep.subr.mxu0 0.0
    %213 = vmatpush1.xpose.msra.mxu0 0.0
    %214 = vmatprep.subr.mxu0 0.0
    %215 = vmatpush1.xpose.msra.mxu0 0.0
    %216 = vmatprep.subr.mxu0 0.0
    %217 = vmatpush1.xpose.msra.mxu0 0.0
    %218 = vmatprep.subr.mxu0 0.0
    %219 = vmatpush1.xpose.msra.mxu0 0.0
    %220 = vmatprep.subr.mxu0 0.0
    %221 = vmatpush1.xpose.msra.mxu0 0.0
    %222 = vmatprep.subr.mxu0 0.0
    %223 = vmatpush1.xpose.msra.mxu0 0.0
    %224 = vmatprep.subr.mxu0 0.0
    %225 = vmatpush1.xpose.msra.mxu0 0.0
    %226 = vmatprep.subr.mxu0 0.0
    %227 = vmatpush1.xpose.msra.mxu0 0.0
    %228 = vmatprep.subr.mxu0 0.0
    %229 = vmatpush1.xpose.msra.mxu0 0.0
    %230 = vmatprep.subr.mxu0 0.0
    %231 = vmatpush1.xpose.msra.mxu0 0.0
    %232 = vmatprep.subr.mxu0 0.0
    %233 = vmatpush1.xpose.msra.mxu0 0.0
    %234 = vmatprep.subr.mxu0 0.0
    %235 = vmatpush1.xpose.msra.mxu0 0.0
    %236 = vmatprep.subr.mxu0 0.0
    %237 = vmatpush1.xpose.msra.mxu0 0.0
    %238 = vmatprep.subr.mxu0 0.0
    %239 = vmatpush1.xpose.msra.mxu0 0.0
    %240 = vmatprep.subr.mxu0 0.0
    %241 = vmatpush1.xpose.msra.mxu0 0.0
    %242 = vmatprep.mubr.f32.mxu0 0.0
    %243 = vmatmul.mubr.f32.gmra.mrb[0].mxu0 %v174
    %v244 = vpop.f32.mrb[0].mxu0
    %v245 = vadd.f32 0.0, %v244
    %v246 = vpop.f32.mrb[0].mxu0
    %247 = vdwg.mxu0
    %249 = vrot.lane.b32.xlu0 %v168, 96
    %v250 = vpop.permute.xlu0 %249
    %v251 = vsel %vm89, %v168, 0
    %v253 = vsel %vm89, %v250, 0
    %255 = vmatprep.subr.mxu0 0.0
    %256 = vmatpush1.xpose.msra.mxu0 %v253
    %257 = vmatprep.subr.mxu0 0.0
    %258 = vmatpush1.xpose.msra.mxu0 0.0
    %259 = vmatprep.subr.mxu0 0.0
    %260 = vmatpush1.xpose.msra.mxu0 0.0
    %261 = vmatprep.subr.mxu0 0.0
    %262 = vmatpush1.xpose.msra.mxu0 0.0
    %263 = vmatprep.subr.mxu0 0.0
    %264 = vmatpush1.xpose.msra.mxu0 0.0
    %265 = vmatprep.subr.mxu0 0.0
    %266 = vmatpush1.xpose.msra.mxu0 0.0
    %267 = vmatprep.subr.mxu0 0.0
    %268 = vmatpush1.xpose.msra.mxu0 0.0
    %269 = vmatprep.subr.mxu0 0.0
    %270 = vmatpush1.xpose.msra.mxu0 0.0
    %271 = vmatprep.subr.mxu0 0.0
    %272 = vmatpush1.xpose.msra.mxu0 0.0
    %273 = vmatprep.subr.mxu0 0.0
    %274 = vmatpush1.xpose.msra.mxu0 0.0
    %275 = vmatprep.subr.mxu0 0.0
    %276 = vmatpush1.xpose.msra.mxu0 0.0
    %277 = vmatprep.subr.mxu0 0.0
    %278 = vmatpush1.xpose.msra.mxu0 0.0
    %279 = vmatprep.subr.mxu0 0.0
    %280 = vmatpush1.xpose.msra.mxu0 0.0
    %281 = vmatprep.subr.mxu0 0.0
    %282 = vmatpush1.xpose.msra.mxu0 0.0
    %283 = vmatprep.subr.mxu0 0.0
    %284 = vmatpush1.xpose.msra.mxu0 0.0
    %285 = vmatprep.subr.mxu0 0.0
    %286 = vmatpush1.xpose.msra.mxu0 0.0
    %287 = vmatprep.subr.mxu0 0.0
    %288 = vmatpush1.xpose.msra.mxu0 0.0
    %289 = vmatprep.subr.mxu0 0.0
    %290 = vmatpush1.xpose.msra.mxu0 0.0
    %291 = vmatprep.subr.mxu0 0.0
    %292 = vmatpush1.xpose.msra.mxu0 0.0
    %293 = vmatprep.subr.mxu0 0.0
    %294 = vmatpush1.xpose.msra.mxu0 0.0
    %295 = vmatprep.subr.mxu0 0.0
    %296 = vmatpush1.xpose.msra.mxu0 0.0
    %297 = vmatprep.subr.mxu0 0.0
    %298 = vmatpush1.xpose.msra.mxu0 0.0
    %299 = vmatprep.subr.mxu0 0.0
    %300 = vmatpush1.xpose.msra.mxu0 0.0
    %301 = vmatprep.subr.mxu0 0.0
    %302 = vmatpush1.xpose.msra.mxu0 0.0
    %303 = vmatprep.subr.mxu0 0.0
    %304 = vmatpush1.xpose.msra.mxu0 0.0
    %305 = vmatprep.subr.mxu0 0.0
    %306 = vmatpush1.xpose.msra.mxu0 0.0
    %307 = vmatprep.subr.mxu0 0.0
    %308 = vmatpush1.xpose.msra.mxu0 0.0
    %309 = vmatprep.subr.mxu0 0.0
    %310 = vmatpush1.xpose.msra.mxu0 0.0
    %311 = vmatprep.subr.mxu0 0.0
    %312 = vmatpush1.xpose.msra.mxu0 0.0
    %313 = vmatprep.subr.mxu0 0.0
    %314 = vmatpush1.xpose.msra.mxu0 0.0
    %315 = vmatprep.subr.mxu0 0.0
    %316 = vmatpush1.xpose.msra.mxu0 0.0
    %317 = vmatprep.subr.mxu0 0.0
    %318 = vmatpush1.xpose.msra.mxu0 0.0
    %319 = vmatprep.mubr.f32.mxu0 0.0
    %320 = vmatmul.mubr.f32.gmra.mrb[0].mxu0 %v251
    %v321 = vpop.f32.mrb[0].mxu0
    %v322 = vadd.f32 0.0, %v321
    %v323 = vpop.f32.mrb[0].mxu0
    %324 = vdwg.mxu0
    %v325 = vmul.f32 %v245, 0.17677669
    %v326 = vmul.f32 %v322, 0.17677669
    %v327 = vadd.f32 %v325, %v78
    %v328 = vadd.f32 %v326, %v79
    %vm329 = vcmask 64512
    %v330 = vsel %vm329, %v327, -inf
    %331 = vmax.xlane.f32.xlu0 %v330
    %v332 = vpop.xlane.xlu0 %331
    %v333 = vsel %vm329, %v328, -inf
    %334 = vmax.xlane.f32.xlu0 %v333
    %v335 = vpop.xlane.xlu0 %334
    %v336 = vsub.f32 %v327, %v332
    %v337 = vsub.f32 %v328, %v335
    %v338 = vmul.f32 %v336, 1.442695
    %v339 = vpow.pop %v338
    %v340 = vmul.f32 %v337, 1.442695
    %v341 = vpow.pop %v340
    %v342 = vsel %vm329, %v339, 0.0
    %343 = vadd.xlane.f32.xlu0 %v342
    %v344 = vpop.xlane.xlu0 %343
    %v345 = vsel %vm329, %v341, 0.0
    %346 = vadd.xlane.f32.xlu0 %v345
    %v347 = vpop.xlane.xlu0 %346
    %v348 = vrcp.pop %v344
    %v349 = vrcp.pop %v347
    %v350 = vmul.f32 %v339, %v348
    %v351 = vmul.f32 %v341, %v349
    %352 = vrot.lane.b32.xlu0 %v163, 64
    %v353 = vpop.permute.xlu0 %352
    %v356 = vsel %vm329, %v350, 0
    %358 = vmatprep.subr.mxu0 0.0
    %359 = vmatpush1.msra.mxu0 %v353
    %360 = vmatprep.subr.mxu0 0.0
    %361 = vmatpush1.msra.mxu0 0.0
    %362 = vmatprep.subr.mxu0 0.0
    %363 = vmatpush1.msra.mxu0 0.0
    %364 = vmatprep.subr.mxu0 0.0
    %365 = vmatpush1.msra.mxu0 0.0
    %366 = vmatprep.subr.mxu0 0.0
    %367 = vmatpush1.msra.mxu0 0.0
    %368 = vmatprep.subr.mxu0 0.0
    %369 = vmatpush1.msra.mxu0 0.0
    %370 = vmatprep.subr.mxu0 0.0
    %371 = vmatpush1.msra.mxu0 0.0
    %372 = vmatprep.subr.mxu0 0.0
    %373 = vmatpush1.msra.mxu0 0.0
    %374 = vmatprep.subr.mxu0 0.0
    %375 = vmatpush1.msra.mxu0 0.0
    %376 = vmatprep.subr.mxu0 0.0
    %377 = vmatpush1.msra.mxu0 0.0
    %378 = vmatprep.subr.mxu0 0.0
    %379 = vmatpush1.msra.mxu0 0.0
    %380 = vmatprep.subr.mxu0 0.0
    %381 = vmatpush1.msra.mxu0 0.0
    %382 = vmatprep.subr.mxu0 0.0
    %383 = vmatpush1.msra.mxu0 0.0
    %384 = vmatprep.subr.mxu0 0.0
    %385 = vmatpush1.msra.mxu0 0.0
    %386 = vmatprep.subr.mxu0 0.0
    %387 = vmatpush1.msra.mxu0 0.0
    %388 = vmatprep.subr.mxu0 0.0
    %389 = vmatpush1.msra.mxu0 0.0
    %390 = vmatprep.subr.mxu0 0.0
    %391 = vmatpush1.msra.mxu0 0.0
    %392 = vmatprep.subr.mxu0 0.0
    %393 = vmatpush1.msra.mxu0 0.0
    %394 = vmatprep.subr.mxu0 0.0
    %395 = vmatpush1.msra.mxu0 0.0
    %396 = vmatprep.subr.mxu0 0.0
    %397 = vmatpush1.msra.mxu0 0.0
    %398 = vmatprep.subr.mxu0 0.0
    %399 = vmatpush1.msra.mxu0 0.0
    %400 = vmatprep.subr.mxu0 0.0
    %401 = vmatpush1.msra.mxu0 0.0
    %402 = vmatprep.subr.mxu0 0.0
    %403 = vmatpush1.msra.mxu0 0.0
    %404 = vmatprep.subr.mxu0 0.0
    %405 = vmatpush1.msra.mxu0 0.0
    %406 = vmatprep.subr.mxu0 0.0
    %407 = vmatpush1.msra.mxu0 0.0
    %408 = vmatprep.subr.mxu0 0.0
    %409 = vmatpush1.msra.mxu0 0.0
    %410 = vmatprep.subr.mxu0 0.0
    %411 = vmatpush1.msra.mxu0 0.0
    %412 = vmatprep.subr.mxu0 0.0
    %413 = vmatpush1.msra.mxu0 0.0
    %414 = vmatprep.subr.mxu0 0.0
    %415 = vmatpush1.msra.mxu0 0.0
    %416 = vmatprep.subr.mxu0 0.0
    %417 = vmatpush1.msra.mxu0 0.0
    %418 = vmatprep.subr.mxu0 0.0
    %419 = vmatpush1.msra.mxu0 0.0
    %420 = vmatprep.subr.mxu0 0.0
    %421 = vmatpush1.msra.mxu0 0.0
    %422 = vmatprep.mubr.f32.mxu0 0.0
    %423 = vmatmul.mubr.f32.gmra.mrb[0].mxu0 %v356
    %v424 = vpop.f32.mrb[0].mxu0
    %v425 = vadd.f32 0.0, %v424
    %v426 = vpop.f32.mrb[0].mxu0
    %427 = vdwg.mxu0
    %428 = vrot.lane.b32.xlu0 %v168, 64
    %v429 = vpop.permute.xlu0 %428
    %v432 = vsel %vm329, %v351, 0
    %434 = vmatprep.subr.mxu0 0.0
    %435 = vmatpush1.msra.mxu0 %v429
    %436 = vmatprep.subr.mxu0 0.0
    %437 = vmatpush1.msra.mxu0 0.0
    %438 = vmatprep.subr.mxu0 0.0
    %439 = vmatpush1.msra.mxu0 0.0
    %440 = vmatprep.subr.mxu0 0.0
    %441 = vmatpush1.msra.mxu0 0.0
    %442 = vmatprep.subr.mxu0 0.0
    %443 = vmatpush1.msra.mxu0 0.0
    %444 = vmatprep.subr.mxu0 0.0
    %445 = vmatpush1.msra.mxu0 0.0
    %446 = vmatprep.subr.mxu0 0.0
    %447 = vmatpush1.msra.mxu0 0.0
    %448 = vmatprep.subr.mxu0 0.0
    %449 = vmatpush1.msra.mxu0 0.0
    %450 = vmatprep.subr.mxu0 0.0
    %451 = vmatpush1.msra.mxu0 0.0
    %452 = vmatprep.subr.mxu0 0.0
    %453 = vmatpush1.msra.mxu0 0.0
    %454 = vmatprep.subr.mxu0 0.0
    %455 = vmatpush1.msra.mxu0 0.0
    %456 = vmatprep.subr.mxu0 0.0
    %457 = vmatpush1.msra.mxu0 0.0
    %458 = vmatprep.subr.mxu0 0.0
    %459 = vmatpush1.msra.mxu0 0.0
    %460 = vmatprep.subr.mxu0 0.0
    %461 = vmatpush1.msra.mxu0 0.0
    %462 = vmatprep.subr.mxu0 0.0
    %463 = vmatpush1.msra.mxu0 0.0
    %464 = vmatprep.subr.mxu0 0.0
    %465 = vmatpush1.msra.mxu0 0.0
    %466 = vmatprep.subr.mxu0 0.0
    %467 = vmatpush1.msra.mxu0 0.0
    %468 = vmatprep.subr.mxu0 0.0
    %469 = vmatpush1.msra.mxu0 0.0
    %470 = vmatprep.subr.mxu0 0.0
    %471 = vmatpush1.msra.mxu0 0.0
    %472 = vmatprep.subr.mxu0 0.0
    %473 = vmatpush1.msra.mxu0 0.0
    %474 = vmatprep.subr.mxu0 0.0
    %475 = vmatpush1.msra.mxu0 0.0
    %476 = vmatprep.subr.mxu0 0.0
    %477 = vmatpush1.msra.mxu0 0.0
    %478 = vmatprep.subr.mxu0 0.0
    %479 = vmatpush1.msra.mxu0 0.0
    %480 = vmatprep.subr.mxu0 0.0
    %481 = vmatpush1.msra.mxu0 0.0
    %482 = vmatprep.subr.mxu0 0.0
    %483 = vmatpush1.msra.mxu0 0.0
    %484 = vmatprep.subr.mxu0 0.0
    %485 = vmatpush1.msra.mxu0 0.0
    %486 = vmatprep.subr.mxu0 0.0
    %487 = vmatpush1.msra.mxu0 0.0
    %488 = vmatprep.subr.mxu0 0.0
    %489 = vmatpush1.msra.mxu0 0.0
    %490 = vmatprep.subr.mxu0 0.0
    %491 = vmatpush1.msra.mxu0 0.0
    %492 = vmatprep.subr.mxu0 0.0
    %493 = vmatpush1.msra.mxu0 0.0
    %494 = vmatprep.subr.mxu0 0.0
    %495 = vmatpush1.msra.mxu0 0.0
    %496 = vmatprep.subr.mxu0 0.0
    %497 = vmatpush1.msra.mxu0 0.0
    %498 = vmatprep.mubr.f32.mxu0 0.0
    %499 = vmatmul.mubr.f32.gmra.mrb[0].mxu0 %v432
    %v500 = vpop.f32.mrb[0].mxu0
    %v501 = vadd.f32 0.0, %v500
    %v502 = vpop.f32.mrb[0].mxu0
    %503 = vdwg.mxu0
    %v504 = vld [vmem:[%s2 + $0x8] sm:$0xff]
    %v505 = vld [vmem:[%s2 + $0x20] sm:$0xff]
    %v506 = vld [vmem:[%s2 + $0x38] sm:$0xff]
    %v507 = vld [vmem:[%s2 + $0x50] sm:$0xff]
    %v508 = vld [vmem:[%s4 + $0x1] sm:$0x1]
    %v509 = vlaneseq
    %v510 = vshrl.u32 %v509, 7
    %v511 = vsub.s32 0, %v510
    %v512 = vrot.slane %v508, %v511
    %517 = vrot.lane.b32.xlu0 %v504, 32
    %v518 = vpop.permute.xlu0 %517
    %519 = vrot.lane.b32.xlu0 %v505, 32
    %v520 = vpop.permute.xlu0 %519
    %521 = vrot.lane.b32.xlu0 %v506, 32
    %v522 = vpop.permute.xlu0 %521
    %523 = vrot.lane.b32.xlu0 %v507, 32
    %v524 = vpop.permute.xlu0 %523
    %v530 = vsel %vm89, %v425, 0
    %v533 = vsel %vm89, %v501, 0
    %535 = vmatprep.subr.mxu0 0.0
    %536 = vmatpush1.msra.mxu0 %v518
    %537 = vmatprep.subr.mxu0 0.0
    %538 = vmatpush1.msra.mxu0 %v520
    %539 = vmatprep.subr.mxu0 0.0
    %540 = vmatpush1.msra.mxu0 %v522
    %541 = vmatprep.subr.mxu0 0.0
    %542 = vmatpush1.msra.mxu0 %v524
    %543 = vmatprep.subr.mxu0 0.0
    %544 = vmatpush1.msra.mxu0 0.0
    %545 = vmatprep.subr.mxu0 0.0
    %546 = vmatpush1.msra.mxu0 0.0
    %547 = vmatprep.subr.mxu0 0.0
    %548 = vmatpush1.msra.mxu0 0.0
    %549 = vmatprep.subr.mxu0 0.0
    %550 = vmatpush1.msra.mxu0 0.0
    %551 = vmatprep.subr.mxu0 0.0
    %552 = vmatpush1.msra.mxu0 0.0
    %553 = vmatprep.subr.mxu0 0.0
    %554 = vmatpush1.msra.mxu0 0.0
    %555 = vmatprep.subr.mxu0 0.0
    %556 = vmatpush1.msra.mxu0 0.0
    %557 = vmatprep.subr.mxu0 0.0
    %558 = vmatpush1.msra.mxu0 0.0
    %559 = vmatprep.subr.mxu0 0.0
    %560 = vmatpush1.msra.mxu0 0.0
    %561 = vmatprep.subr.mxu0 0.0
    %562 = vmatpush1.msra.mxu0 0.0
    %563 = vmatprep.subr.mxu0 0.0
    %564 = vmatpush1.msra.mxu0 0.0
    %565 = vmatprep.subr.mxu0 0.0
    %566 = vmatpush1.msra.mxu0 0.0
    %567 = vmatprep.subr.mxu0 0.0
    %568 = vmatpush1.msra.mxu0 0.0
    %569 = vmatprep.subr.mxu0 0.0
    %570 = vmatpush1.msra.mxu0 0.0
    %571 = vmatprep.subr.mxu0 0.0
    %572 = vmatpush1.msra.mxu0 0.0
    %573 = vmatprep.subr.mxu0 0.0
    %574 = vmatpush1.msra.mxu0 0.0
    %575 = vmatprep.subr.mxu0 0.0
    %576 = vmatpush1.msra.mxu0 0.0
    %577 = vmatprep.subr.mxu0 0.0
    %578 = vmatpush1.msra.mxu0 0.0
    %579 = vmatprep.subr.mxu0 0.0
    %580 = vmatpush1.msra.mxu0 0.0
    %581 = vmatprep.subr.mxu0 0.0
    %582 = vmatpush1.msra.mxu0 0.0
    %583 = vmatprep.subr.mxu0 0.0
    %584 = vmatpush1.msra.mxu0 0.0
    %585 = vmatprep.subr.mxu0 0.0
    %586 = vmatpush1.msra.mxu0 0.0
    %587 = vmatprep.subr.mxu0 0.0
    %588 = vmatpush1.msra.mxu0 0.0
    %589 = vmatprep.subr.mxu0 0.0
    %590 = vmatpush1.msra.mxu0 0.0
    %591 = vmatprep.subr.mxu0 0.0
    %592 = vmatpush1.msra.mxu0 0.0
    %593 = vmatprep.subr.mxu0 0.0
    %594 = vmatpush1.msra.mxu0 0.0
    %595 = vmatprep.subr.mxu0 0.0
    %596 = vmatpush1.msra.mxu0 0.0
    %597 = vmatprep.subr.mxu0 0.0
    %598 = vmatpush1.msra.mxu0 0.0
    %599 = vmatprep.mubr.f32.mxu0 0.0
    %600 = vmatmul.mubr.f32.gmra.mrb[0].mxu0 %v530
    %v601 = vpop.f32.mrb[0].mxu0
    %v602 = vadd.f32 %v512, %v601
    %v603 = vpop.f32.mrb[0].mxu0
    %604 = vmatprep.mubr.f32.mxu0 0.0
    %605 = vmatmul.mubr.f32.gmra.mrb[0].mxu0 %v533
    %v606 = vpop.f32.mrb[0].mxu0
    %v607 = vadd.f32 %v512, %v606
    %v608 = vpop.f32.mrb[0].mxu0
    %609 = vdwg.mxu0
    %v610 = vadd.f32 %v35, %v602
    %v611 = vadd.f32 %v36, %v607
    %v612 = vld [vmem:[%s4 + $0x2] sm:$0x1]
    %v613 = vld [vmem:[%s4 + $0x3] sm:$0x1]
    %v614 = vsel %vm89, %v610, 0.0
    %615 = vadd.xlane.f32.xlu0 %v614
    %v616 = vpop.xlane.xlu0 %615
    %v617 = vsel %vm89, %v611, 0.0
    %618 = vadd.xlane.f32.xlu0 %v617
    %v619 = vpop.xlane.xlu0 %618
    %v620 = vrcp.pop 32.0
    %v621 = vmul.f32 %v616, %v620
    %v622 = vmul.f32 %v619, %v620
    %v623 = vsub.f32 %v610, %v621
    %v624 = vsub.f32 %v611, %v622
    %v625 = vmul.f32 %v623, %v623
    %v626 = vmul.f32 %v624, %v624
    %v627 = vsel %vm89, %v625, 0.0
    %628 = vadd.xlane.f32.xlu0 %v627
    %v629 = vpop.xlane.xlu0 %628
    %v630 = vsel %vm89, %v626, 0.0
    %631 = vadd.xlane.f32.xlu0 %v630
    %v632 = vpop.xlane.xlu0 %631
    %v633 = vmul.f32 %v629, %v620
    %v634 = vmul.f32 %v632, %v620
    %v635 = vadd.f32 %v633, 1e-12
    %v636 = vadd.f32 %v634, 1e-12
    %v637 = vrsqrt.pop %v635
    %v638 = vrsqrt.pop %v636
    %v639 = vmul.f32 %v623, %v637
    %v640 = vmul.f32 %v624, %v638
    %v641 = vlaneseq
    %v642 = vshrl.u32 %v641, 7
    %v643 = vsub.s32 0, %v642
    %v644 = vrot.slane %v612, %v643
    %v645 = vmul.f32 %v639, %v644
    %v646 = vmul.f32 %v640, %v644
    %v647 = vlaneseq
    %v648 = vshrl.u32 %v647, 7
    %v649 = vsub.s32 0, %v648
    %v650 = vrot.slane %v613, %v649
    %v651 = vadd.f32 %v645, %v650
    %v652 = vadd.f32 %v646, %v650
    %v653 = vld [vmem:[%s2 + $0x10] sm:$0xff]
    %v654 = vld [vmem:[%s2 + $0x28] sm:$0xff]
    %v655 = vld [vmem:[%s2 + $0x40] sm:$0xff]
    %v656 = vld [vmem:[%s2 + $0x58] sm:$0xff]
    %v657 = vld [vmem:[%s4 + $0x4] sm:$0x1]
    %v658 = vlaneseq
    %v659 = vshrl.u32 %v658, 7
    %v660 = vsub.s32 0, %v659
    %v661 = vrot.slane %v657, %v660
    %v663 = vsel %vm89, %v651, 0
    %v666 = vsel %vm89, %v652, 0
    %668 = vmatprep.subr.mxu0 0.0
    %669 = vmatpush1.msra.mxu0 %v653
    %670 = vmatprep.subr.mxu0 0.0
    %671 = vmatpush1.msra.mxu0 %v654
    %672 = vmatprep.subr.mxu0 0.0
    %673 = vmatpush1.msra.mxu0 %v655
    %674 = vmatprep.subr.mxu0 0.0
    %675 = vmatpush1.msra.mxu0 %v656
    %676 = vmatprep.subr.mxu0 0.0
    %677 = vmatpush1.msra.mxu0 0.0
    %678 = vmatprep.subr.mxu0 0.0
    %679 = vmatpush1.msra.mxu0 0.0
    %680 = vmatprep.subr.mxu0 0.0
    %681 = vmatpush1.msra.mxu0 0.0
    %682 = vmatprep.subr.mxu0 0.0
    %683 = vmatpush1.msra.mxu0 0.0
    %684 = vmatprep.subr.mxu0 0.0
    %685 = vmatpush1.msra.mxu0 0.0
    %686 = vmatprep.subr.mxu0 0.0
    %687 = vmatpush1.msra.mxu0 0.0
    %688 = vmatprep.subr.mxu0 0.0
    %689 = vmatpush1.msra.mxu0 0.0
    %690 = vmatprep.subr.mxu0 0.0
    %691 = vmatpush1.msra.mxu0 0.0
    %692 = vmatprep.subr.mxu0 0.0
    %693 = vmatpush1.msra.mxu0 0.0
    %694 = vmatprep.subr.mxu0 0.0
    %695 = vmatpush1.msra.mxu0 0.0
    %696 = vmatprep.subr.mxu0 0.0
    %697 = vmatpush1.msra.mxu0 0.0
    %698 = vmatprep.subr.mxu0 0.0
    %699 = vmatpush1.msra.mxu0 0.0
    %700 = vmatprep.subr.mxu0 0.0
    %701 = vmatpush1.msra.mxu0 0.0
    %702 = vmatprep.subr.mxu0 0.0
    %703 = vmatpush1.msra.mxu0 0.0
    %704 = vmatprep.subr.mxu0 0.0
    %705 = vmatpush1.msra.mxu0 0.0
    %706 = vmatprep.subr.mxu0 0.0
    %707 = vmatpush1.msra.mxu0 0.0
    %708 = vmatprep.subr.mxu0 0.0
    %709 = vmatpush1.msra.mxu0 0.0
    %710 = vmatprep.subr.mxu0 0.0
    %711 = vmatpush1.msra.mxu0 0.0
    %712 = vmatprep.subr.mxu0 0.0
    %713 = vmatpush1.msra.mxu0 0.0
    %714 = vmatprep.subr.mxu0 0.0
    %715 = vmatpush1.msra.mxu0 0.0
    %716 = vmatprep.subr.mxu0 0.0
    %717 = vmatpush1.msra.mxu0 0.0
    %718 = vmatprep.subr.mxu0 0.0
    %719 = vmatpush1.msra.mxu0 0.0
    %720 = vmatprep.subr.mxu0 0.0
    %721 = vmatpush1.msra.mxu0 0.0
    %722 = vmatprep.subr.mxu0 0.0
    %723 = vmatpush1.msra.mxu0 0.0
    %724 = vmatprep.subr.mxu0 0.0
    %725 = vmatpush1.msra.mxu0 0.0
    %726 = vmatprep.subr.mxu0 0.0
    %727 = vmatpush1.msra.mxu0 0.0
    %728 = vmatprep.subr.mxu0 0.0
    %729 = vmatpush1.msra.mxu0 0.0
    %730 = vmatprep.subr.mxu0 0.0
    %731 = vmatpush1.msra.mxu0 0.0
    %732 = vmatprep.mubr.f32.mxu0 0.0
    %733 = vmatmul.mubr.f32.gmra.mrb[0].mxu0 %v663
    %v734 = vpop.f32.mrb[0].mxu0
    %v735 = vadd.f32 %v661, %v734
    %v736 = vpop.f32.mrb[0].mxu0
    %737 = vmatprep.mubr.f32.mxu0 0.0
    %738 = vmatmul.mubr.f32.gmra.mrb[0].mxu0 %v666
    %v739 = vpop.f32.mrb[0].mxu0
    %v740 = vadd.f32 %v661, %v739
    %v741 = vpop.f32.mrb[0].mxu0
    %742 = vdwg.mxu0
    %v743 = vmul.f32 %v735, %v735
    %v744 = vmul.f32 %v740, %v740
    %v745 = vmul.f32 %v735, %v743
    %v746 = vmul.f32 %v740, %v744
    %v747 = vmul.f32 %v745, 0.044715
    %v748 = vmul.f32 %v746, 0.044715
    %v749 = vadd.f32 %v735, %v747
    %v750 = vadd.f32 %v740, %v748
    %v751 = vmul.f32 %v749, 0.7978846
    %v752 = vmul.f32 %v750, 0.7978846
    %v753 = vtanh.pop %v751
    %v754 = vtanh.pop %v752
    %v755 = vadd.f32 %v753, 1.0
    %v756 = vadd.f32 %v754, 1.0
    %v757 = vmul.f32 %v755, 0.5
    %v758 = vmul.f32 %v756, 0.5
    %v759 = vmul.f32 %v735, %v757
    %v760 = vmul.f32 %v740, %v758
    %v761 = vld [vmem:[%s3] sm:$0xff]
    %v762 = vld [vmem:[%s3 + $0x8] sm:$0xff]
    %v763 = vld [vmem:[%s3 + $0x10] sm:$0xff]
    %v764 = vld [vmem:[%s3 + $0x18] sm:$0xff]
    %v765 = vld [vmem:[%s3 + $0x20] sm:$0xff]
    %v766 = vld [vmem:[%s3 + $0x28] sm:$0xff]
    %v767 = vld [vmem:[%s3 + $0x30] sm:$0xff]
    %v768 = vld [vmem:[%s3 + $0x38] sm:$0xff]
    %v769 = vld [vmem:[%s4 + $0x5] sm:$0x1]
    %v770 = vlaneseq
    %v771 = vshrl.u32 %v770, 7
    %v772 = vsub.s32 0, %v771
    %v773 = vrot.slane %v769, %v772
    %vm774 = vcmask 523264
    %v776 = vsel %vm774, %v759, 0
    %v779 = vsel %vm774, %v760, 0
    %781 = vmatprep.subr.mxu0 0.0
    %782 = vmatpush1.msra.mxu0 %v761
    %783 = vmatprep.subr.mxu0 0.0
    %784 = vmatpush1.msra.mxu0 %v762
    %785 = vmatprep.subr.mxu0 0.0
    %786 = vmatpush1.msra.mxu0 %v763
    %787 = vmatprep.subr.mxu0 0.0
    %788 = vmatpush1.msra.mxu0 %v764
    %789 = vmatprep.subr.mxu0 0.0
    %790 = vmatpush1.msra.mxu0 %v765
    %791 = vmatprep.subr.mxu0 0.0
    %792 = vmatpush1.msra.mxu0 %v766
    %793 = vmatprep.subr.mxu0 0.0
    %794 = vmatpush1.msra.mxu0 %v767
    %795 = vmatprep.subr.mxu0 0.0
    %796 = vmatpush1.msra.mxu0 %v768
    %797 = vmatprep.subr.mxu0 0.0
    %798 = vmatpush1.msra.mxu0 0.0
    %799 = vmatprep.subr.mxu0 0.0
    %800 = vmatpush1.msra.mxu0 0.0
    %801 = vmatprep.subr.mxu0 0.0
    %802 = vmatpush1.msra.mxu0 0.0
    %803 = vmatprep.subr.mxu0 0.0
    %804 = vmatpush1.msra.mxu0 0.0
    %805 = vmatprep.subr.mxu0 0.0
    %806 = vmatpush1.msra.mxu0 0.0
    %807 = vmatprep.subr.mxu0 0.0
    %808 = vmatpush1.msra.mxu0 0.0
    %809 = vmatprep.subr.mxu0 0.0
    %810 = vmatpush1.msra.mxu0 0.0
    %811 = vmatprep.subr.mxu0 0.0
    %812 = vmatpush1.msra.mxu0 0.0
    %813 = vmatprep.subr.mxu0 0.0
    %814 = vmatpush1.msra.mxu0 0.0
    %815 = vmatprep.subr.mxu0 0.0
    %816 = vmatpush1.msra.mxu0 0.0
    %817 = vmatprep.subr.mxu0 0.0
    %818 = vmatpush1.msra.mxu0 0.0
    %819 = vmatprep.subr.mxu0 0.0
    %820 = vmatpush1.msra.mxu0 0.0
    %821 = vmatprep.subr.mxu0 0.0
    %822 = vmatpush1.msra.mxu0 0.0
    %823 = vmatprep.subr.mxu0 0.0
    %824 = vmatpush1.msra.mxu0 0.0
    %825 = vmatprep.subr.mxu0 0.0
    %826 = vmatpush1.msra.mxu0 0.0
    %827 = vmatprep.subr.mxu0 0.0
    %828 = vmatpush1.msra.mxu0 0.0
    %829 = vmatprep.subr.mxu0 0.0
    %830 = vmatpush1.msra.mxu0 0.0
    %831 = vmatprep.subr.mxu0 0.0
    %832 = vmatpush1.msra.mxu0 0.0
    %833 = vmatprep.subr.mxu0 0.0
    %834 = vmatpush1.msra.mxu0 0.0
    %835 = vmatprep.subr.mxu0 0.0
    %836 = vmatpush1.msra.mxu0 0.0
    %837 = vmatprep.subr.mxu0 0.0
    %838 = vmatpush1.msra.mxu0 0.0
    %839 = vmatprep.subr.mxu0 0.0
    %840 = vmatpush1.msra.mxu0 0.0
    %841 = vmatprep.subr.mxu0 0.0
    %842 = vmatpush1.msra.mxu0 0.0
    %843 = vmatprep.subr.mxu0 0.0
    %844 = vmatpush1.msra.mxu0 0.0
    %845 = vmatprep.mubr.f32.mxu0 0.0
    %846 = vmatmul.mubr.f32.gmra.mrb[0].mxu0 %v776
    %v847 = vpop.f32.mrb[0].mxu0
    %v848 = vadd.f32 %v773, %v847
    %v849 = vpop.f32.mrb[0].mxu0
    %850 = vmatprep.mubr.f32.mxu0 0.0
    %851 = vmatmul.mubr.f32.gmra.mrb[0].mxu0 %v779
    %v852 = vpop.f32.mrb[0].mxu0
    %v853 = vadd.f32 %v773, %v852
    %v854 = vpop.f32.mrb[0].mxu0
    %855 = vdwg.mxu0
    %v856 = vadd.f32 %v651, %v848
    %v857 = vadd.f32 %v652, %v853
    %v858 = vld [vmem:[%s4 + $0x6] sm:$0x1]
    %v859 = vld [vmem:[%s4 + $0x7] sm:$0x1]
    %v860 = vsel %vm89, %v856, 0.0
    %861 = vadd.xlane.f32.xlu0 %v860
    %v862 = vpop.xlane.xlu0 %861
    %v863 = vsel %vm89, %v857, 0.0
    %864 = vadd.xlane.f32.xlu0 %v863
    %v865 = vpop.xlane.xlu0 %864
    %v866 = vmul.f32 %v862, %v620
    %v867 = vmul.f32 %v865, %v620
    %v868 = vsub.f32 %v856, %v866
    %v869 = vsub.f32 %v857, %v867
    %v870 = vmul.f32 %v868, %v868
    %v871 = vmul.f32 %v869, %v869
    %v872 = vsel %vm89, %v870, 0.0
    %873 = vadd.xlane.f32.xlu0 %v872
    %v874 = vpop.xlane.xlu0 %873
    %v875 = vsel %vm89, %v871, 0.0
    %876 = vadd.xlane.f32.xlu0 %v875
    %v877 = vpop.xlane.xlu0 %876
    %v878 = vmul.f32 %v874, %v620
    %v879 = vmul.f32 %v877, %v620
    %v880 = vadd.f32 %v878, 1e-12
    %v881 = vadd.f32 %v879, 1e-12
    %v882 = vrsqrt.pop %v880
    %v883 = vrsqrt.pop %v881
    %v884 = vmul.f32 %v868, %v882
    %v885 = vmul.f32 %v869, %v883
    %v886 = vlaneseq
    %v887 = vshrl.u32 %v886, 7
    %v888 = vsub.s32 0, %v887
    %v889 = vrot.slane %v858, %v888
    %v890 = vmul.f32 %v884, %v889
    %v891 = vmul.f32 %v885, %v889
    %v892 = vlaneseq
    %v893 = vshrl.u32 %v892, 7
    %v894 = vsub.s32 0, %v893
    %v895 = vrot.slane %v859, %v894
    %v896 = vadd.f32 %v890, %v895
    %v897 = vadd.f32 %v891, %v895
    %v898 = vld [vmem:[%s4 + $0x8] sm:$0x1]
    %v899 = vlaneseq
    %v900 = vshrl.u32 %v899, 7
    %v901 = vsub.s32 0, %v900
    %v902 = vrot.slane %v898, %v901
    %v905 = vrot.slane %v897, 7
    %vm906 = vcmask 1041409
    %v907 = vsel %vm906, %v905, %v896
    %912 = vrot.lane.b32.xlu0 %v653, 64
    %v913 = vpop.permute.xlu0 %912
    %914 = vrot.lane.b32.xlu0 %v654, 64
    %v915 = vpop.permute.xlu0 %914
    %916 = vrot.lane.b32.xlu0 %v655, 64
    %v917 = vpop.permute.xlu0 %916
    %918 = vrot.lane.b32.xlu0 %v656, 64
    %v919 = vpop.permute.xlu0 %918
    %v924 = vsel %vm89, %v907, 0
    %926 = vmatprep.subr.mxu0 0.0
    %927 = vmatpush1.msra.mxu0 %v913
    %928 = vmatprep.subr.mxu0 0.0
    %929 = vmatpush1.msra.mxu0 %v915
    %930 = vmatprep.subr.mxu0 0.0
    %931 = vmatpush1.msra.mxu0 %v917
    %932 = vmatprep.subr.mxu0 0.0
    %933 = vmatpush1.msra.mxu0 %v919
    %934 = vmatprep.subr.mxu0 0.0
    %935 = vmatpush1.msra.mxu0 0.0
    %936 = vmatprep.subr.mxu0 0.0
    %937 = vmatpush1.msra.mxu0 0.0
    %938 = vmatprep.subr.mxu0 0.0
    %939 = vmatpush1.msra.mxu0 0.0
    %940 = vmatprep.subr.mxu0 0.0
    %941 = vmatpush1.msra.mxu0 0.0
    %942 = vmatprep.subr.mxu0 0.0
    %943 = vmatpush1.msra.mxu0 0.0
    %944 = vmatprep.subr.mxu0 0.0
    %945 = vmatpush1.msra.mxu0 0.0
    %946 = vmatprep.subr.mxu0 0.0
    %947 = vmatpush1.msra.mxu0 0.0
    %948 = vmatprep.subr.mxu0 0.0
    %949 = vmatpush1.msra.mxu0 0.0
    %950 = vmatprep.subr.mxu0 0.0
    %951 = vmatpush1.msra.mxu0 0.0
    %952 = vmatprep.subr.mxu0 0.0
    %953 = vmatpush1.msra.mxu0 0.0
    %954 = vmatprep.subr.mxu0 0.0
    %955 = vmatpush1.msra.mxu0 0.0
    %956 = vmatprep.subr.mxu0 0.0
    %957 = vmatpush1.msra.mxu0 0.0
    %958 = vmatprep.subr.mxu0 0.0
    %959 = vmatpush1.msra.mxu0 0.0
    %960 = vmatprep.subr.mxu0 0.0
    %961 = vmatpush1.msra.mxu0 0.0
    %962 = vmatprep.subr.mxu0 0.0
    %963 = vmatpush1.msra.mxu0 0.0
    %964 = vmatprep.subr.mxu0 0.0
    %965 = vmatpush1.msra.mxu0 0.0
    %966 = vmatprep.subr.mxu0 0.0
    %967 = vmatpush1.msra.mxu0 0.0
    %968 = vmatprep.subr.mxu0 0.0
    %969 = vmatpush1.msra.mxu0 0.0
    %970 = vmatprep.subr.mxu0 0.0
    %971 = vmatpush1.msra.mxu0 0.0
    %972 = vmatprep.subr.mxu0 0.0
    %973 = vmatpush1.msra.mxu0 0.0
    %974 = vmatprep.subr.mxu0 0.0
    %975 = vmatpush1.msra.mxu0 0.0
    %976 = vmatprep.subr.mxu0 0.0
    %977 = vmatpush1.msra.mxu0 0.0
    %978 = vmatprep.subr.mxu0 0.0
    %979 = vmatpush1.msra.mxu0 0.0
    %980 = vmatprep.subr.mxu0 0.0
    %981 = vmatpush1.msra.mxu0 0.0
    %982 = vmatprep.subr.mxu0 0.0
    %983 = vmatpush1.msra.mxu0 0.0
    %984 = vmatprep.subr.mxu0 0.0
    %985 = vmatpush1.msra.mxu0 0.0
    %986 = vmatprep.subr.mxu0 0.0
    %987 = vmatpush1.msra.mxu0 0.0
    %988 = vmatprep.subr.mxu0 0.0
    %989 = vmatpush1.msra.mxu0 0.0
    %990 = vmatprep.mubr.f32.mxu0 0.0
    %991 = vmatmul.mubr.f32.gmra.mrb[0].mxu0 %v924
    %v992 = vpop.f32.mrb[0].mxu0
    %v993 = vadd.f32 %v902, %v992
    %v994 = vpop.f32.mrb[0].mxu0
    %995 = vdwg.mxu0
    %v996 = vtanh.pop %v993
    %v997 = vld [vmem:[%s2] sm:$0xff]
    %v998 = vld [vmem:[%s2 + $0x18] sm:$0xff]
    %v999 = vld [vmem:[%s2 + $0x30] sm:$0xff]
    %v1000 = vld [vmem:[%s2 + $0x48] sm:$0xff]
    %v1001 = vld [vmem:[%s4 + $0x9] sm:$0x1]
    %v1002 = vlaneseq
    %v1003 = vshrl.u32 %v1002, 7
    %v1004 = vsub.s32 0, %v1003
    %v1005 = vrot.slane %v1001, %v1004
    %v1007 = vsel %vm89, %v996, 0
    %1009 = vmatprep.subr.mxu0 0.0
    %1010 = vmatpush1.msra.mxu0 %v997
    %1011 = vmatprep.subr.mxu0 0.0
    %1012 = vmatpush1.msra.mxu0 %v998
    %1013 = vmatprep.subr.mxu0 0.0
    %1014 = vmatpush1.msra.mxu0 %v999
    %1015 = vmatprep.subr.mxu0 0.0
    %1016 = vmatpush1.msra.mxu0 %v1000
    %1017 = vmatprep.subr.mxu0 0.0
    %1018 = vmatpush1.msra.mxu0 0.0
    %1019 = vmatprep.subr.mxu0 0.0
    %1020 = vmatpush1.msra.mxu0 0.0
    %1021 = vmatprep.subr.mxu0 0.0
    %1022 = vmatpush1.msra.mxu0 0.0
    %1023 = vmatprep.subr.mxu0 0.0
    %1024 = vmatpush1.msra.mxu0 0.0
    %1025 = vmatprep.subr.mxu0 0.0
    %1026 = vmatpush1.msra.mxu0 0.0
    %1027 = vmatprep.subr.mxu0 0.0
    %1028 = vmatpush1.msra.mxu0 0.0
    %1029 = vmatprep.subr.mxu0 0.0
    %1030 = vmatpush1.msra.mxu0 0.0
    %1031 = vmatprep.subr.mxu0 0.0
    %1032 = vmatpush1.msra.mxu0 0.0
    %1033 = vmatprep.subr.mxu0 0.0
    %1034 = vmatpush1.msra.mxu0 0.0
    %1035 = vmatprep.subr.mxu0 0.0
    %1036 = vmatpush1.msra.mxu0 0.0
    %1037 = vmatprep.subr.mxu0 0.0
    %1038 = vmatpush1.msra.mxu0 0.0
    %1039 = vmatprep.subr.mxu0 0.0
    %1040 = vmatpush1.msra.mxu0 0.0
    %1041 = vmatprep.subr.mxu0 0.0
    %1042 = vmatpush1.msra.mxu0 0.0
    %1043 = vmatprep.subr.mxu0 0.0
    %1044 = vmatpush1.msra.mxu0 0.0
    %1045 = vmatprep.subr.mxu0 0.0
    %1046 = vmatpush1.msra.mxu0 0.0
    %1047 = vmatprep.subr.mxu0 0.0
    %1048 = vmatpush1.msra.mxu0 0.0
    %1049 = vmatprep.subr.mxu0 0.0
    %1050 = vmatpush1.msra.mxu0 0.0
    %1051 = vmatprep.subr.mxu0 0.0
    %1052 = vmatpush1.msra.mxu0 0.0
    %1053 = vmatprep.subr.mxu0 0.0
    %1054 = vmatpush1.msra.mxu0 0.0
    %1055 = vmatprep.subr.mxu0 0.0
    %1056 = vmatpush1.msra.mxu0 0.0
    %1057 = vmatprep.subr.mxu0 0.0
    %1058 = vmatpush1.msra.mxu0 0.0
    %1059 = vmatprep.subr.mxu0 0.0
    %1060 = vmatpush1.msra.mxu0 0.0
    %1061 = vmatprep.subr.mxu0 0.0
    %1062 = vmatpush1.msra.mxu0 0.0
    %1063 = vmatprep.subr.mxu0 0.0
    %1064 = vmatpush1.msra.mxu0 0.0
    %1065 = vmatprep.subr.mxu0 0.0
    %1066 = vmatpush1.msra.mxu0 0.0
    %1067 = vmatprep.subr.mxu0 0.0
    %1068 = vmatpush1.msra.mxu0 0.0
    %1069 = vmatprep.subr.mxu0 0.0
    %1070 = vmatpush1.msra.mxu0 0.0
    %1071 = vmatprep.subr.mxu0 0.0
    %1072 = vmatpush1.msra.mxu0 0.0
    %1073 = vmatprep.mubr.f32.mxu0 0.0
    %1074 = vmatmul.mubr.f32.gmra.mrb[0].mxu0 %v1007
    %v1075 = vpop.f32.mrb[0].mxu0
    %v1076 = vadd.f32 %v1005, %v1075
    %v1077 = vpop.f32.mrb[0].mxu0
    %1078 = vdwg.mxu0
    %1079 = vst [vmem:[#allocation5] sm:$0x3] %v1076
    // Predicated region
    $region26: #{tpu_custom_call.1} parent=1 // pred_check
      _
    $region27: #{tpu_custom_call.1} parent=1 // pred_check_branch
      %1081 = sbr.rel (0) target = $region29
    $region28: #{tpu_custom_call.1} parent=1 // pred_region
      %s1083 = ssub.s32 32, 32
      %1084 = vsyncadd [#allocation4], %s1083
      %s1086 = sshll.u32 [#allocation5], 4
      %s1087 = int_to_ptr.vmem [resolvable:$true] %s1086
      %1089 = dma.vmem_to_hbm [thread:$0]  %s1087, 32, %s5, [#allocation4]
    $region29: #{tpu_custom_call.1} parent=1 // pred_fallthru
      _
    // Predicated region
    $region30: #{tpu_custom_call.1} parent=1 // pred_check
      _
    $region31: #{tpu_custom_call.1} parent=1 // pred_check_branch
      %1091 = sbr.rel (0) target = $region33
    $region32: #{tpu_custom_call.1} parent=1 // pred_region
      %1092 = dma.done [#allocation4], 32
    $region33: #{tpu_custom_call.1} parent=1 // pred_fallthru
      _
    %1093 = vsyncpa [#allocation3], 1
    %1094 = vsyncpa [#allocation4], 1

</llo_original>
